<compile_context>
chip_gen: v6e
topology: v6e:2x2x1
jax: 0.10.0
libtpu: 0.0.40
codegen_flags: <defaults>
</compile_context>

<pallas_src>
import functools

import numpy as np
import jax
import jax.numpy as jnp
from jax.experimental import pallas as pl
from jax.experimental.pallas import tpu as pltpu

EPS = 1e-5          # nn.LayerNorm default
NEG_BIG = -1e30     # finite "-inf"


# ----------------------------- generation-aware sizing -----------------------------
def _tpu_vmem_capacity_bytes():
    cap = 128 * 1024 * 1024                      # v5e / v6e default
    try:
        info = pltpu.get_tpu_info()
        cap = int(getattr(info, "vmem_capacity_bytes", cap))
    except Exception:
        pass
    return cap


_VMEM_CAP = _tpu_vmem_capacity_bytes()
# ~25% headroom for compiler-internal scratch (matters most on v7x's 64 MiB VMEM).
_VMEM_BUDGET = int(_VMEM_CAP * 3 // 4)
# Bigger resident tiles on the 128 MiB parts (v5e/v6e); stay modest on v7x.
_ROW_CAP = 2048 if _VMEM_CAP >= 96 * 1024 * 1024 else 1024


def _supports_buffered():
    try:
        pl.BlockSpec((8, 128), lambda i: (0, 0), pipeline_mode=pl.Buffered(1))
        return True
    except Exception:
        return False


_HAS_BUFFERED = _supports_buffered()


def _const_spec(shape):
    """BlockSpec for a grid-invariant operand.

    Its index_map is constant, so double-buffering buys zero overlap; single-buffer
    it (pl.Buffered(1)) to halve the VMEM reserved for weights."""
    idx = lambda b: (0,) * len(shape)
    if _HAS_BUFFERED:
        return pl.BlockSpec(shape, idx, pipeline_mode=pl.Buffered(1))
    return pl.BlockSpec(shape, idx)


def _row_tile(n, cap):
    """Largest multiple-of-8 divisor of n <= cap (sublane-legal); else full n."""
    best = None
    t = 8
    while t <= min(n, cap):
        if n % t == 0:
            best = t
        t += 8
    return best if best is not None else n


def _col_tile(n, cap):
    """Largest multiple-of-128 divisor of n <= cap (lane-legal); else full n."""
    best = None
    t = 128
    while t <= min(n, cap):
        if n % t == 0:
            best = t
        t += 128
    return best if best is not None else n


def _pick_batch_tile(B, S, row_cap):
    """Largest divisor of B with bt*S <= row_cap rows, while keeping >= 2 grid
    steps (so v7x's 2 TensorCores both get work and the pipeline has >1 stage)."""
    best = 1
    for bt in range(1, B + 1):
        if B % bt:
            continue
        if bt * S > row_cap:
            continue
        if B >= 2 and B // bt < 2:
            continue
        best = bt
    return best


# ----------------------------- math helpers -----------------------------
def _ln(x, g, b):
    mu = jnp.mean(x, axis=-1, keepdims=True)
    var = jnp.mean((x - mu) ** 2, axis=-1, keepdims=True)
    return (x - mu) * jax.lax.rsqrt(var + EPS) * g + b


def _gelu_exact(x):
    # F.gelu default = exact (erf) gelu.
    # TODO(synk): on v5e, gate a tanh (EUP) approximation behind a flag if VALU binds.
    return 0.5 * x * (1.0 + jax.lax.erf(x * (2.0 ** -0.5)))


# ---------------- LayerNorm kernel (embedding layer-norm), row tiled ----------------
def _layernorm_kernel(x_ref, g_ref, b_ref, o_ref):
    o_ref[...] = _ln(x_ref[...], g_ref[...], b_ref[...])


def layernorm_pallas(x2d, g, b):
    N, D = x2d.shape
    tm = _row_tile(N, 1024)
    return pl.pallas_call(
        _layernorm_kernel,
        out_shape=jax.ShapeDtypeStruct((N, D), jnp.float32),
        grid=(N // tm,),
        in_specs=[pl.BlockSpec((tm, D), lambda i: (i, 0)),
                  _const_spec((1, D)),
                  _const_spec((1, D))],
        out_specs=pl.BlockSpec((tm, D), lambda i: (i, 0)),
        compiler_params=pltpu.CompilerParams(
            dimension_semantics=("parallel",),
            vmem_limit_bytes=_VMEM_BUDGET),
    )(x2d, g.reshape(1, D), b.reshape(1, D))


# ---------------- Vocab projection: bf16 operands, weight-resident grid order ------
def _vocab_kernel(x_ref, w_ref, b_ref, o_ref):
    o_ref[...] = (jnp.dot(x_ref[...].astype(jnp.bfloat16), w_ref[...],
                          preferred_element_type=jnp.float32) + b_ref[...])


def vocab_proj_pallas(x2d, w_bf16, b):
    # TODO(synk): add a K grid axis with an f32 VMEM accumulator for very large d_model.
    N, D = x2d.shape
    V = w_bf16.shape[1]
    tm = _row_tile(N, 512)
    tn = _col_tile(V, 512)
    # Vocab-column axis OUTER, row axis inner: the (D, tn) weight tile index is
    # constant across the inner row sweep, so the biggest tensor is fetched once
    # per column tile instead of once per (row, column) tile.
    return pl.pallas_call(
        _vocab_kernel,
        out_shape=jax.ShapeDtypeStruct((N, V), jnp.float32),
        grid=(V // tn, N // tm),
        in_specs=[pl.BlockSpec((tm, D), lambda j, i: (i, 0)),
                  pl.BlockSpec((D, tn), lambda j, i: (0, j)),
                  pl.BlockSpec((1, tn), lambda j, i: (0, j))],
        out_specs=pl.BlockSpec((tm, tn), lambda j, i: (i, j)),
        compiler_params=pltpu.CompilerParams(
            dimension_semantics=("parallel", "arbitrary"),
            vmem_limit_bytes=_VMEM_BUDGET),
    )(x2d, w_bf16, b.reshape(1, V))


# ---------------- Fused Transformer encoder-layer kernel ----------------
def _encoder_layer_kernel(x_ref, m_ref,
                          wq_ref, wk_ref, wv_ref, bq_ref, bk_ref, bv_ref,
                          wo_ref, bo_ref, w1_ref, b1_ref, w2_ref, b2_ref,
                          g1_ref, be1_ref, g2_ref, be2_ref,
                          o_ref, ctx_ref,
                          *, nhead, d_model, bt, seq, ffn_chunk):
    hd = d_model // nhead
    bf16 = jnp.bfloat16

    x = x_ref[...]                          # (Bt, S, D) f32
    xf = x.reshape(bt * seq, d_model)       # row-batched: Bt*S rows feed the MXU
    x_bf = xf.astype(bf16)

    # Hoisted once: JAX does not CSE broadcast_in_dim, so doing this inside the
    # head loop would materialize it nhead times.
    addm = jnp.broadcast_to(m_ref[...], (bt, seq, seq))   # (Bt, S, S) f32

    # --- q/k/v projections (1/sqrt(hd) folded into wq/bq at prep time) ---
    q = jnp.dot(x_bf, wq_ref[...], preferred_element_type=jnp.float32) + bq_ref[...]
    k = jnp.dot(x_bf, wk_ref[...], preferred_element_type=jnp.float32) + bk_ref[...]
    v = jnp.dot(x_bf, wv_ref[...], preferred_element_type=jnp.float32) + bv_ref[...]
    q3 = q.reshape(bt, seq, d_model).astype(bf16)
    k3 = k.reshape(bt, seq, d_model).astype(bf16)
    v3 = v.reshape(bt, seq, d_model).astype(bf16)

    # --- self-attention: per head one Bt-batched contraction on the last axis
    # (no k.T), f32 softmax; head outputs written to a bf16 VMEM scratch at their
    # lane offset instead of a jnp.concatenate relayout in the epilogue. ---
    # TODO(synk): flash-style query/key block tiling (online softmax) for S >= 512,
    # which matters first on v7x (64 MiB VMEM).
    for h in range(nhead):
        sl = slice(h * hd, (h + 1) * hd)
        s = jnp.einsum('bqd,bkd->bqk', q3[:, :, sl], k3[:, :, sl],
                       preferred_element_type=jnp.float32)          # (Bt, S, S)
        s = s + addm
        s = s - jnp.max(s, axis=-1, keepdims=True)
        p = jnp.exp(s)
        p = p * pl.reciprocal(jnp.sum(p, axis=-1, keepdims=True), approx=True)
        head = jnp.einsum('bqk,bkd->bqd', p.astype(bf16), v3[:, :, sl],
                          preferred_element_type=jnp.float32)        # (Bt, S, hd)
        ctx_ref[:, sl] = head.reshape(bt * seq, hd).astype(bf16)

    attn = jnp.dot(ctx_ref[...], wo_ref[...],
                   preferred_element_type=jnp.float32) + bo_ref[...]

    # --- residual + norm1 (f32) ---
    x1 = _ln(xf + attn, g1_ref[...], be1_ref[...])
    x1_bf = x1.astype(bf16)

    # --- feed-forward, chunked over dff columns: the f32 hidden tensor stays
    # bounded at (rows, ffn_chunk) instead of (rows, dff). ---
    dff = w1_ref.shape[1]
    ff = None
    for c0 in range(0, dff, ffn_chunk):
        ce = c0 + ffn_chunk
        hid = jnp.dot(x1_bf, w1_ref[:, c0:ce],
                      preferred_element_type=jnp.float32) + b1_ref[:, c0:ce]
        hid = _gelu_exact(hid).astype(bf16)
        part = jnp.dot(hid, w2_ref[c0:ce, :], preferred_element_type=jnp.float32)
        ff = part if ff is None else ff + part
    ff = ff + b2_ref[...]

    # --- residual + norm2 (f32) ---
    o_ref[...] = _ln(x1 + ff, g2_ref[...], be2_ref[...]).reshape(bt, seq, d_model)


def encoder_layer_pallas(x, addmask, lp, nhead, bt):
    B, S, D = x.shape
    F_ = lp['w1'].shape[1]
    ffn_chunk = _col_tile(F_, 512)

    kern = functools.partial(_encoder_layer_kernel, nhead=nhead, d_model=D,
                             bt=bt, seq=S, ffn_chunk=ffn_chunk)

    in_specs = [
        pl.BlockSpec((bt, S, D), lambda b: (b, 0, 0)),      # x
        pl.BlockSpec((bt, 1, S), lambda b: (b, 0, 0)),      # additive padding mask
        _const_spec((D, D)), _const_spec((D, D)), _const_spec((D, D)),   # wq, wk, wv
        _const_spec((1, D)), _const_spec((1, D)), _const_spec((1, D)),   # bq, bk, bv
        _const_spec((D, D)), _const_spec((1, D)),                        # wo, bo
        _const_spec((D, F_)), _const_spec((1, F_)),                      # w1, b1
        _const_spec((F_, D)), _const_spec((1, D)),                       # w2, b2
        _const_spec((1, D)), _const_spec((1, D)),                        # ln1 g/b
        _const_spec((1, D)), _const_spec((1, D)),                        # ln2 g/b
    ]
    return pl.pallas_call(
        kern,
        out_shape=jax.ShapeDtypeStruct((B, S, D), jnp.float32),
        grid=(B // bt,),
        in_specs=in_specs,
        out_specs=pl.BlockSpec((bt, S, D), lambda b: (b, 0, 0)),
        scratch_shapes=[pltpu.VMEM((bt * S, D), jnp.bfloat16)],   # ctx (head outputs)
        compiler_params=pltpu.CompilerParams(
            dimension_semantics=("parallel",),
            vmem_limit_bytes=_VMEM_BUDGET),
    )(x, addmask,
      lp['wq'], lp['wk'], lp['wv'], lp['bq'], lp['bk'], lp['bv'],
      lp['wo'], lp['bo'], lp['w1'], lp['b1'], lp['w2'], lp['b2'],
      lp['ln1_g'], lp['ln1_b'], lp['ln2_g'], lp['ln2_b'])


# ---------------- One-time parameter preparation (no per-forward re-cast) ----------
def prepare_params(params, nhead):
    D = params['tok_emb'].shape[1]
    hd = D // nhead
    scale = 1.0 / (hd ** 0.5)
    bf16 = jnp.bfloat16
    prepped = {
        'tok_emb': params['tok_emb'],
        'pos_emb': params['pos_emb'],
        'ln_g': params['ln_g'], 'ln_b': params['ln_b'],
        'w_vocab_bf16': params['w_vocab'].astype(bf16),
        'b_vocab': params['b_vocab'],
        'layers': [],
    }
    for lp in params['layers']:
        wqkv, bqkv = lp['wqkv'], lp['bqkv']
        wq, wk, wv = wqkv[:, :D], wqkv[:, D:2 * D], wqkv[:, 2 * D:]
        bq, bk, bv = bqkv[:D], bqkv[D:2 * D], bqkv[2 * D:]
        F_ = lp['w1'].shape[1]
        prepped['layers'].append({
            'wq': (wq * scale).astype(bf16),          # fold 1/sqrt(hd) into wq/bq
            'wk': wk.astype(bf16),
            'wv': wv.astype(bf16),
            'bq': (bq * scale).reshape(1, D),
            'bk': bk.reshape(1, D),
            'bv': bv.reshape(1, D),
            'wo': lp['wo'].astype(bf16), 'bo': lp['bo'].reshape(1, D),
            'w1': lp['w1'].astype(bf16), 'b1': lp['b1'].reshape(1, F_),
            'w2': lp['w2'].astype(bf16), 'b2': lp['b2'].reshape(1, D),
            'ln1_g': lp['ln1_g'].reshape(1, D), 'ln1_b': lp['ln1_b'].reshape(1, D),
            'ln2_g': lp['ln2_g'].reshape(1, D), 'ln2_b': lp['ln2_b'].reshape(1, D),
        })
    return prepped


# ---------------- Full NLPTransformer forward ----------------
def nlp_transformer_forward(input_ids, prepped, nhead, pad_idx=0):
    B, S = input_ids.shape
    D = prepped['tok_emb'].shape[1]
    # Embedding gathers are data-dependent; done in plain JAX (glue).
    tok = prepped['tok_emb'][input_ids]                    # (B, S, D)
    pos = prepped['pos_emb'][jnp.arange(S)]                # (S, D)
    emb = tok + pos[None]
    # dropout -> identity (eval)
    emb = layernorm_pallas(emb.reshape(B * S, D),
                           prepped['ln_g'], prepped['ln_b']).reshape(B, S, D)
    # key_padding_mask as additive finite large-negative bias over keys
    addmask = jnp.where(input_ids == pad_idx, NEG_BIG, 0.0).astype(jnp.float32)
    addmask = addmask.reshape(B, 1, S)
    bt = _pick_batch_tile(B, S, _ROW_CAP)
    h = emb
    for lp in prepped['layers']:
        h = encoder_layer_pallas(h, addmask, lp, nhead, bt)
    logits = vocab_proj_pallas(h.reshape(B * S, D),
                               prepped['w_vocab_bf16'], prepped['b_vocab'])
    return logits.reshape(B, S, -1)


# ---------------- Pure-JAX f32 reference (same math as the PyTorch module) ----------
def reference_forward(input_ids, params, nhead, pad_idx=0):
    B, S = input_ids.shape
    D = params['tok_emb'].shape[1]
    x = _ln(params['tok_emb'][input_ids] + params['pos_emb'][jnp.arange(S)][None],
            params['ln_g'], params['ln_b'])
    neg = jnp.where(input_ids == pad_idx, NEG_BIG, 0.0)[:, None, :]
    hd = D // nhead
    scale = 1.0 / (hd ** 0.5)
    for lp in params['layers']:
        qkv = x @ lp['wqkv'] + lp['bqkv']
        q, k, v = qkv[..., :D], qkv[..., D:2 * D], qkv[..., 2 * D:]
        outs = []
        for h in range(nhead):
            sl = slice(h * hd, (h + 1) * hd)
            s = (q[..., sl] * scale) @ jnp.swapaxes(k[..., sl], -1, -2) + neg
            outs.append(jax.nn.softmax(s, axis=-1) @ v[..., sl])
        attn = jnp.concatenate(outs, axis=-1) @ lp['wo'] + lp['bo']
        x = _ln(x + attn, lp['ln1_g'], lp['ln1_b'])
        ff = _gelu_exact(x @ lp['w1'] + lp['b1']) @ lp['w2'] + lp['b2']
        x = _ln(x + ff, lp['ln2_g'], lp['ln2_b'])
    return x @ params['w_vocab'] + params['b_vocab']


# ---------------- Deterministic parameter init ----------------
def init_params(key, vocab, d_model, nhead, nlayers, dff, max_len):
    std = 0.02
    keys = jax.random.split(key, 3 + nlayers)
    p = {
        'tok_emb': std * jax.random.normal(keys[0], (vocab, d_model), jnp.float32),
        'pos_emb': std * jax.random.normal(keys[1], (max_len, d_model), jnp.float32),
        'ln_g': jnp.ones((d_model,), jnp.float32),
        'ln_b': jnp.zeros((d_model,), jnp.float32),
        'w_vocab': std * jax.random.normal(keys[2], (d_model, vocab), jnp.float32),
        'b_vocab': jnp.zeros((vocab,), jnp.float32),
        'layers': [],
    }
    for i in range(nlayers):
        lk = jax.random.split(keys[3 + i], 4)
        p['layers'].append({
            'wqkv': std * jax.random.normal(lk[0], (d_model, 3 * d_model), jnp.float32),
            'bqkv': jnp.zeros((3 * d_model,), jnp.float32),
            'wo': std * jax.random.normal(lk[1], (d_model, d_model), jnp.float32),
            'bo': jnp.zeros((d_model,), jnp.float32),
            'w1': std * jax.random.normal(lk[2], (d_model, dff), jnp.float32),
            'b1': jnp.zeros((dff,), jnp.float32),
            'w2': std * jax.random.normal(lk[3], (dff, d_model), jnp.float32),
            'b2': jnp.zeros((d_model,), jnp.float32),
            'ln1_g': jnp.ones((d_model,), jnp.float32),
            'ln1_b': jnp.zeros((d_model,), jnp.float32),
            'ln2_g': jnp.ones((d_model,), jnp.float32),
            'ln2_b': jnp.zeros((d_model,), jnp.float32),
        })
    return p


if __name__ == "__main__":
    # Small config consistent with the module's constructor signature.
    vocab_size, d_model, nhead = 64, 32, 4
    num_layers, dim_ff, max_len = 2, 64, 16
    B, S = 2, 8

    key = jax.random.PRNGKey(0)
    kp, kid = jax.random.split(key)
    params = init_params(kp, vocab_size, d_model, nhead, num_layers, dim_ff, max_len)
    prepped = prepare_params(params, nhead)    # one-time weight split / bf16 cast

    input_ids = jax.random.randint(kid, (B, S), 1, vocab_size, dtype=jnp.int32)
    # a few pad tokens (pad_idx=0) so key_padding_mask is exercised; every row
    # keeps at least one non-pad key.
    input_ids = input_ids.at[0, -2:].set(0).at[1, -1].set(0)

    logits = nlp_transformer_forward(input_ids, prepped, nhead, pad_idx=0)
    logits = jax.block_until_ready(logits)
    assert logits.shape == (B, S, vocab_size)

    # Reference is full f32; the kernels use bf16 MXU operands (f32 accumulate)
    # for all GEMMs including the vocab projection, so tolerance is loosened
    # accordingly (measured errors well inside these bounds).
    ref = reference_forward(input_ids, params, nhead, pad_idx=0)
    np.testing.assert_allclose(np.asarray(logits), np.asarray(ref),
                               rtol=2e-2, atol=3e-3)
    print("KERNEL_OK")
</pallas_src>

<mosaic_0001>
module attributes {stable_mosaic.version = 11 : i64} {
  func.func @_layernorm_kernel(%arg0: i32, %arg1: memref<16x32xf32, #tpu.memory_space<vmem>>, %arg2: memref<1x32xf32, #tpu.memory_space<vmem>>, %arg3: memref<1x32xf32, #tpu.memory_space<vmem>>, %arg4: memref<16x32xf32, #tpu.memory_space<vmem>>) attributes {dimension_semantics = [#tpu.dimension_semantics<parallel>], iteration_bounds = array<i64: 1>, scalar_prefetch = 0 : i64, scratch_operands = 0 : i64, tpu.core_type = #tpu.core_type<tc>, window_params = [{transform_indices = @transform_0, window_bounds = array<i64: 16, 32>}, {pipeline_mode = #tpu.pipeline_mode<synchronous>, transform_indices = @transform_1, window_bounds = array<i64: 1, 32>}, {pipeline_mode = #tpu.pipeline_mode<synchronous>, transform_indices = @transform_2, window_bounds = array<i64: 1, 32>}, {transform_indices = @transform_3, window_bounds = array<i64: 16, 32>}]} {
    %c0 = arith.constant 0 : index
    %c0_0 = arith.constant 0 : index
    %0 = vector.load %arg1[%c0, %c0_0] : memref<16x32xf32, #tpu.memory_space<vmem>>, vector<16x32xf32>
    %c0_1 = arith.constant 0 : index
    %c0_2 = arith.constant 0 : index
    %1 = vector.load %arg2[%c0_1, %c0_2] : memref<1x32xf32, #tpu.memory_space<vmem>>, vector<1x32xf32>
    %c0_3 = arith.constant 0 : index
    %c0_4 = arith.constant 0 : index
    %2 = vector.load %arg3[%c0_3, %c0_4] : memref<1x32xf32, #tpu.memory_space<vmem>>, vector<1x32xf32>
    %cst = arith.constant dense<0.000000e+00> : vector<16xf32>
    %3 = vector.multi_reduction <add>, %0, %cst [1] : vector<16x32xf32> to vector<16xf32>
    %4 = vector.shape_cast %3 : vector<16xf32> to vector<16x1xf32>
    %cst_5 = arith.constant 3.200000e+01 : f32
    %5 = vector.broadcast %cst_5 : f32 to vector<16x1xf32>
    %6 = arith.divf %4, %5 : vector<16x1xf32>
    %7 = vector.broadcast %6 : vector<16x1xf32> to vector<16x32xf32>
    %8 = arith.subf %0, %7 : vector<16x32xf32>
    %9 = arith.mulf %8, %8 : vector<16x32xf32>
    %cst_6 = arith.constant dense<0.000000e+00> : vector<16xf32>
    %10 = vector.multi_reduction <add>, %9, %cst_6 [1] : vector<16x32xf32> to vector<16xf32>
    %11 = vector.shape_cast %10 : vector<16xf32> to vector<16x1xf32>
    %cst_7 = arith.constant 3.200000e+01 : f32
    %12 = vector.broadcast %cst_7 : f32 to vector<16x1xf32>
    %13 = arith.divf %11, %12 : vector<16x1xf32>
    %14 = vector.broadcast %6 : vector<16x1xf32> to vector<16x32xf32>
    %15 = arith.subf %0, %14 : vector<16x32xf32>
    %cst_8 = arith.constant 9.99999974E-6 : f32
    %16 = vector.broadcast %cst_8 : f32 to vector<16x1xf32>
    %17 = arith.addf %13, %16 : vector<16x1xf32>
    %18 = math.rsqrt %17 : vector<16x1xf32>
    %19 = vector.broadcast %18 : vector<16x1xf32> to vector<16x32xf32>
    %20 = arith.mulf %15, %19 : vector<16x32xf32>
    %21 = vector.broadcast %1 : vector<1x32xf32> to vector<16x32xf32>
    %22 = arith.mulf %20, %21 : vector<16x32xf32>
    %23 = vector.broadcast %2 : vector<1x32xf32> to vector<16x32xf32>
    %24 = arith.addf %22, %23 : vector<16x32xf32>
    %c0_9 = arith.constant 0 : index
    %c0_10 = arith.constant 0 : index
    %25 = vector.load %arg4[%c0_9, %c0_10] : memref<16x32xf32, #tpu.memory_space<vmem>>, vector<16x32xf32>
    tpu.vector_store %arg4[%c0_9, %c0_10], %24 {strides = array<i32>} : memref<16x32xf32, #tpu.memory_space<vmem>>, vector<16x32xf32>,
    return
  }
  func.func @transform_0(%arg0: i32) -> (i32, i32) {
    %c0_i32 = arith.constant 0 : i32
    %c0_i32_0 = arith.constant 0 : i32
    return %arg0, %c0_i32 : i32, i32
  }
  func.func @transform_1(%arg0: i32) -> (i32, i32) {
    %c0_i32 = arith.constant 0 : i32
    %c0_i32_0 = arith.constant 0 : i32
    %c0_i32_1 = arith.constant 0 : i32
    return %c0_i32, %c0_i32_0 : i32, i32
  }
  func.func @transform_2(%arg0: i32) -> (i32, i32) {
    %c0_i32 = arith.constant 0 : i32
    %c0_i32_0 = arith.constant 0 : i32
    %c0_i32_1 = arith.constant 0 : i32
    return %c0_i32, %c0_i32_0 : i32, i32
  }
  func.func @transform_3(%arg0: i32) -> (i32, i32) {
    %c0_i32 = arith.constant 0 : i32
    %c0_i32_0 = arith.constant 0 : i32
    return %arg0, %c0_i32 : i32, i32
  }
}

</mosaic_0001>

<llo_original>
// kernel: tpu_custom_call.1
$region0: #{tpu_custom_call.1}
  #allocation0 [shape = 'u32[]', space=smem, size = 0x4, offset = 0x4, fixed_abs, tag = 'smem constant byte address 0x4 - core index']
  #allocation1 [shape = 'u32[144,128]{1,0:T(1,128)}', space=vmem, size = 0x12000, scoped, tag = 'internal scratch']
  %s0 = inlined_call_operand.hbm [shape: f32[16,32], index: 0, kind: input, shape index: {}]
  %s1 = inlined_call_operand.vmem [shape: f32[1,32], index: 1, kind: input, shape index: {}]
  %s2 = inlined_call_operand.vmem [shape: f32[1,32], index: 2, kind: input, shape index: {}]
  %s3 = inlined_call_operand.hbm [shape: f32[16,32], index: 3, kind: output, shape index: {}]
  %s4 = sld [smem:[#allocation0]]
  $region26: #{tpu_custom_call.1} parent=0
    _
  %s6 = ssub.s32 1, %s4
  %s7 = scalar_select 0, %s6, %s4
  $region1: #{tpu_custom_call.1} parent=0
    #allocation2 [shape = 'u8[8192]{0}', space=vmem, size = 0x2000, scoped, tag = 'input window, operand 0, single buffered']
    #allocation3 [shape = 's32[1]{0}', space=sflag, size = 0x4, scoped, tag = 'scoped memory for tpu_custom_call.1']
    #allocation4 [shape = 's32[1]{0}', space=sflag, size = 0x4, scoped, tag = 'scoped memory for tpu_custom_call.1']
    #allocation5 [shape = 'u8[8192]{0}', space=vmem, size = 0x2000, scoped, tag = 'output window, operand 0, single buffered']
    %8 = vsyncpa [#allocation3], 0
    %9 = vsyncpa [#allocation4], 0
    // Predicated region
    $region2: #{tpu_custom_call.1} parent=1 // pred_check
      _
    $region3: #{tpu_custom_call.1} parent=1 // pred_check_branch
      %11 = sbr.rel (0) target = $region5
    $region4: #{tpu_custom_call.1} parent=1 // pred_region
      %s13 = ssub.s32 256, 256
      %14 = vsyncadd [#allocation3], %s13
      %s15 = sshll.u32 [#allocation2], 4
      %s16 = int_to_ptr.vmem [resolvable:$true] %s15
      %21 = dma.hbm_to_vmem [thread:$0]  %s0, 256, %s16, [#allocation3], 128, 128, 8
    $region5: #{tpu_custom_call.1} parent=1 // pred_fallthru
      _
    // Predicated region
    $region6: #{tpu_custom_call.1} parent=1 // pred_check
      _
    $region7: #{tpu_custom_call.1} parent=1 // pred_check_branch
      %23 = sbr.rel (0) target = $region9
    $region8: #{tpu_custom_call.1} parent=1 // pred_region
      _
    $region9: #{tpu_custom_call.1} parent=1 // pred_fallthru
      _
    // Predicated region
    $region10: #{tpu_custom_call.1} parent=1 // pred_check
      _
    $region11: #{tpu_custom_call.1} parent=1 // pred_check_branch
      %25 = sbr.rel (0) target = $region13
    $region12: #{tpu_custom_call.1} parent=1 // pred_region
      _
    $region13: #{tpu_custom_call.1} parent=1 // pred_fallthru
      _
    // Predicated region
    $region14: #{tpu_custom_call.1} parent=1 // pred_check
      _
    $region15: #{tpu_custom_call.1} parent=1 // pred_check_branch
      %27 = sbr.rel (0) target = $region17
    $region16: #{tpu_custom_call.1} parent=1 // pred_region
      %28 = dma.done [#allocation3], 256
    $region17: #{tpu_custom_call.1} parent=1 // pred_fallthru
      _
    %v29 = vld [vmem:[#allocation2] sm:$0xff]
    %v30 = vld [vmem:[#allocation2 + $0x8] sm:$0xff]
    %v31 = vld [vmem:[%s1] sm:$0x1]
    %v32 = vld [vmem:[%s2] sm:$0x1]
    %vm33 = vcmask 261120
    %v34 = vsel %vm33, %v29, 0.0
    %35 = vadd.xlane.f32.xlu0 %v34
    %v36 = vpop.xlane.xlu0 %35
    %v37 = vsel %vm33, %v30, 0.0
    %38 = vadd.xlane.f32.xlu0 %v37
    %v39 = vpop.xlane.xlu0 %38
    %v40 = vrcp.pop 32.0
    %v41 = vmul.f32 %v36, %v40
    %v42 = vmul.f32 %v39, %v40
    %v43 = vsub.f32 %v29, %v41
    %v44 = vsub.f32 %v30, %v42
    %v45 = vmul.f32 %v43, %v43
    %v46 = vmul.f32 %v44, %v44
    %v47 = vsel %vm33, %v45, 0.0
    %48 = vadd.xlane.f32.xlu0 %v47
    %v49 = vpop.xlane.xlu0 %48
    %v50 = vsel %vm33, %v46, 0.0
    %51 = vadd.xlane.f32.xlu0 %v50
    %v52 = vpop.xlane.xlu0 %51
    %v53 = vmul.f32 %v49, %v40
    %v54 = vmul.f32 %v52, %v40
    %v55 = vadd.f32 %v53, 1e-05
    %v56 = vadd.f32 %v54, 1e-05
    %v57 = vrsqrt.pop %v55
    %v58 = vrsqrt.pop %v56
    %v59 = vmul.f32 %v43, %v57
    %v60 = vmul.f32 %v44, %v58
    %v62 = vlaneseq
    %v63 = vshrl.u32 %v62, 7
    %v64 = vsub.s32 0, %v63
    %v65 = vrot.slane %v31, %v64
    %v67 = vmul.f32 %v59, %v65
    %v68 = vmul.f32 %v60, %v65
    %v70 = vlaneseq
    %v71 = vshrl.u32 %v70, 7
    %v72 = vsub.s32 0, %v71
    %v73 = vrot.slane %v32, %v72
    %v75 = vadd.f32 %v67, %v73
    %v76 = vadd.f32 %v68, %v73
    %77 = vst.msk [vmem:[#allocation5] sm:$0xff] %vm33, %v75
    %78 = vst.msk [vmem:[#allocation5 + $0x8] sm:$0xff] %vm33, %v76
    // Predicated region
    $region18: #{tpu_custom_call.1} parent=1 // pred_check
      _
    $region19: #{tpu_custom_call.1} parent=1 // pred_check_branch
      %80 = sbr.rel (0) target = $region21
    $region20: #{tpu_custom_call.1} parent=1 // pred_region
      %s82 = ssub.s32 256, 256
      %83 = vsyncadd [#allocation4], %s82
      %s84 = sshll.u32 [#allocation5], 4
      %s85 = int_to_ptr.vmem [resolvable:$true] %s84
      %90 = dma.vmem_to_hbm [thread:$0]  %s85, 256, %s3, [#allocation4], 128, 128, 8
    $region21: #{tpu_custom_call.1} parent=1 // pred_fallthru
      _
    // Predicated region
    $region22: #{tpu_custom_call.1} parent=1 // pred_check
      _
    $region23: #{tpu_custom_call.1} parent=1 // pred_check_branch
      %92 = sbr.rel (0) target = $region25
    $region24: #{tpu_custom_call.1} parent=1 // pred_region
      %93 = dma.done [#allocation4], 256
    $region25: #{tpu_custom_call.1} parent=1 // pred_fallthru
      _
    %94 = vsyncpa [#allocation3], 1
    %95 = vsyncpa [#allocation4], 1

</llo_original>
